<compile_context>
chip_gen: v7x
topology: tpu7x:2x2x1
jax: 0.10.0
libtpu: 0.0.40
codegen_flags: <defaults>
</compile_context>

<pallas_src>
import functools
import math

import jax
import jax.numpy as jnp
from jax.experimental import pallas as pl
from jax.experimental.pallas import tpu as pltpu


def _round_up(x, m):
    return ((x + m - 1) // m) * m


def _pad2d(a, rows, cols):
    """Zero-pad a 2D array to (rows, cols); no-op (no extra HBM pass) if already sized."""
    if a.shape == (rows, cols):
        return a
    return jnp.pad(a, ((0, rows - a.shape[0]), (0, cols - a.shape[1])))


def _default_vmem_limit_bytes():
    try:
        cap = pltpu.get_tpu_info().vmem_capacity_bytes
    except Exception:
        cap = 64 * 1024 * 1024  # conservative (v7x) fallback
    return int(min((cap * 3) // 4, 110 * 1024 * 1024))


def _prenorm_ff_kernel(x_ref, w1_ref, b1_ref, w2_ref, b2_ref, o_ref,
                       xn_sc, acc_sc, *, dim_real, pad_cols, eps):
    # x_ref : (TM, dim_p)  native dtype    w1_ref: (dim_p, tk_h) bf16 (gamma folded in)
    # b1_ref: (1, tk_h)    f32 (beta fold) w2_ref: (tk_h, dim_p) bf16
    # b2_ref: (1, dim_p)   f32             o_ref : (TM, dim_p)   native dtype
    # xn_sc : (TM, dim_p)  bf16 scratch    acc_sc: (TM, dim_p)   f32 scratch
    k = pl.program_id(1)
    nk = pl.num_programs(1)

    @pl.when(k == 0)
    def _():
        x = x_ref[...].astype(jnp.float32)
        inv_n = 1.0 / dim_real
        mean = jnp.sum(x, axis=-1, keepdims=True) * inv_n
        d = x - mean
        # Centered variance. Padded lanes of x are zero, so each contributes
        # exactly mean^2 to sum(d*d); subtract that analytically.
        var = (jnp.sum(d * d, axis=-1, keepdims=True)
               - pad_cols * (mean * mean)) * inv_n
        # gamma/beta are folded into w1/b1; padded lanes of xn are harmless
        # because the corresponding rows of w1 are zero.
        xn_sc[...] = (d * jax.lax.rsqrt(var + eps)).astype(xn_sc.dtype)
        acc_sc[...] = jnp.zeros_like(acc_sc)

    # Linear 1 (bf16 MXU operands, fp32 accumulate) + exact erf GELU (torch default).
    h = jnp.dot(xn_sc[...], w1_ref[...],
                preferred_element_type=jnp.float32) + b1_ref[...]
    h = 0.5 * h * (1.0 + jax.lax.erf(h * (1.0 / math.sqrt(2.0))))

    # Linear 2 partial product over this hidden chunk, accumulated in fp32.
    acc_sc[...] += jnp.dot(h.astype(jnp.bfloat16), w2_ref[...],
                           preferred_element_type=jnp.float32)

    @pl.when(k == nk - 1)
    def _():
        o_ref[...] = (acc_sc[...] + b2_ref[...]).astype(o_ref.dtype)


def prenorm_feedforward(x, gamma, beta, w1, b1, w2, b2, *, eps=1e-5, tm=None):
    """x: (batch, seq, dim) -> (batch, seq, dim).  Linear weights stored (in, out)."""
    batch, seq, dim = x.shape
    hidden = w1.shape[1]
    M = batch * seq

    dim_p = _round_up(dim, 128)
    hid_p = _round_up(hidden, 128)

    # Row tile: larger tiles amortize per-step pipeline overhead; clamp to M.
    if tm is None:
        tm = 512 if dim_p <= 512 else 256
    tm = max(8, min(tm, _round_up(M, 8)))
    M_p = _round_up(M, tm)

    # Hidden-chunk tile (second grid axis) bounds resident weights and the live
    # (TM, tk_h) intermediate so large hidden dims fit v7x's 64 MiB VMEM.
    if hid_p <= 1024:
        tk_h = hid_p
    else:
        tk_h = 1024
        while hid_p % tk_h:
            tk_h -= 128
    num_k = hid_p // tk_h

    # Fold LayerNorm affine into the first Linear (done once per call, on weights).
    w1f = gamma.astype(jnp.float32)[:, None] * w1.astype(jnp.float32)
    b1f = b1.astype(jnp.float32) + beta.astype(jnp.float32) @ w1.astype(jnp.float32)

    w1_p = _pad2d(w1f, dim_p, hid_p).astype(jnp.bfloat16)
    b1_p = _pad2d(b1f.reshape(1, hidden), 1, hid_p)
    w2_p = _pad2d(w2.astype(jnp.float32), hid_p, dim_p).astype(jnp.bfloat16)
    b2_p = _pad2d(b2.astype(jnp.float32).reshape(1, dim), 1, dim_p)

    # Stream activations in their native dtype; pad only when actually needed.
    x2d = _pad2d(x.reshape(M, dim), M_p, dim_p)

    kernel = functools.partial(_prenorm_ff_kernel, dim_real=float(dim),
                               pad_cols=float(dim_p - dim), eps=float(eps))

    # When num_k == 1 the weight blocks never change -> single-buffer them too.
    w_bufs = 1 if num_k == 1 else None   # None -> default double buffering

    def run(use_pipeline_mode):
        def bspec(shape, index_map, buffers):
            if use_pipeline_mode and buffers is not None:
                return pl.BlockSpec(shape, index_map,
                                    pipeline_mode=pl.Buffered(buffers))
            return pl.BlockSpec(shape, index_map)

        return pl.pallas_call(
            kernel,
            out_shape=jax.ShapeDtypeStruct((M_p, dim_p), x.dtype),
            grid_spec=pltpu.PrefetchScalarGridSpec(
                num_scalar_prefetch=0,
                grid=(M_p // tm, num_k),
                in_specs=[
                    bspec((tm, dim_p), lambda i, k: (i, 0), None),     # x tile (streamed)
                    bspec((dim_p, tk_h), lambda i, k: (0, k), w_bufs), # w1 chunk (bf16)
                    bspec((1, tk_h), lambda i, k: (0, k), w_bufs),     # b1 chunk
                    bspec((tk_h, dim_p), lambda i, k: (k, 0), w_bufs), # w2 chunk (bf16)
                    bspec((1, dim_p), lambda i, k: (0, 0), 1),         # b2 (constant)
                ],
                out_specs=pl.BlockSpec((tm, dim_p), lambda i, k: (i, 0)),
                scratch_shapes=[
                    pltpu.VMEM((tm, dim_p), jnp.bfloat16),   # normalized activations
                    pltpu.VMEM((tm, dim_p), jnp.float32),    # fp32 output accumulator
                ],
            ),
            compiler_params=pltpu.CompilerParams(
                dimension_semantics=("parallel", "arbitrary"),
                vmem_limit_bytes=_default_vmem_limit_bytes(),
            ),
        )(x2d, w1_p, b1_p, w2_p, b2_p)

    try:
        out2d = run(True)
    except Exception:
        # Fallback for jax versions without BlockSpec pipeline_mode / pl.Buffered
        # support in the TPU pipeline; identical semantics, default buffering.
        out2d = run(False)

    if (M_p, dim_p) != (M, dim):
        out2d = out2d[:M, :dim]
    return out2d.reshape(batch, seq, dim)


def init_params(key, dim, hidden_dim):
    """LayerNorm affine (PyTorch default init) + two Linear layers stored (in, out)."""
    k1, k2, k3, k4 = jax.random.split(key, 4)
    gamma = jnp.ones((dim,), jnp.float32)
    beta = jnp.zeros((dim,), jnp.float32)
    bound1 = 1.0 / math.sqrt(dim)
    bound2 = 1.0 / math.sqrt(hidden_dim)
    w1 = jax.random.uniform(k1, (dim, hidden_dim), jnp.float32, -bound1, bound1)
    b1 = jax.random.uniform(k2, (hidden_dim,), jnp.float32, -bound1, bound1)
    w2 = jax.random.uniform(k3, (hidden_dim, dim), jnp.float32, -bound2, bound2)
    b2 = jax.random.uniform(k4, (dim,), jnp.float32, -bound2, bound2)
    return gamma, beta, w1, b1, w2, b2


if __name__ == "__main__":
    batch, seq, dim, hidden_dim = 2, 8, 32, 64

    key = jax.random.PRNGKey(0)
    kx, kp = jax.random.split(key)
    x = jax.random.normal(kx, (batch, seq, dim), jnp.float32)
    gamma, beta, w1, b1, w2, b2 = init_params(kp, dim, hidden_dim)

    out = prenorm_feedforward(x, gamma, beta, w1, b1, w2, b2)
    out = jax.block_until_ready(out)

    # Pure-JAX fp32 reference: LayerNorm -> Linear -> erf-GELU -> Linear.
    x2 = x.reshape(-1, dim)
    mu = x2.mean(axis=-1, keepdims=True)
    var = x2.var(axis=-1, keepdims=True)                       # biased, matches PyTorch
    xn = (x2 - mu) / jnp.sqrt(var + 1e-5) * gamma + beta
    h = xn @ w1 + b1
    h = 0.5 * h * (1.0 + jax.lax.erf(h / math.sqrt(2.0)))
    y_ref = (h @ w2 + b2).reshape(batch, seq, dim)

    # bf16 matmul operands -> relaxed tolerance (fp32 accumulation).
    assert jnp.allclose(out, y_ref, atol=3e-2, rtol=3e-2), \
        f"max err {jnp.max(jnp.abs(out - y_ref))}"

    print("KERNEL_OK")
</pallas_src>

<mosaic_0001>
module attributes {stable_mosaic.version = 11 : i64} {
  func.func @_prenorm_ff_kernel(%arg0: i32, %arg1: i32, %arg2: memref<16x128xf32, #tpu.memory_space<vmem>>, %arg3: memref<128x128xbf16, #tpu.memory_space<vmem>>, %arg4: memref<1x128xf32, #tpu.memory_space<vmem>>, %arg5: memref<128x128xbf16, #tpu.memory_space<vmem>>, %arg6: memref<1x128xf32, #tpu.memory_space<vmem>>, %arg7: memref<16x128xf32, #tpu.memory_space<vmem>>, %arg8: memref<16x128xbf16, #tpu.memory_space<vmem>>, %arg9: memref<16x128xf32, #tpu.memory_space<vmem>>) attributes {dimension_semantics = [#tpu.dimension_semantics<parallel>, #tpu.dimension_semantics<arbitrary>], iteration_bounds = array<i64: 1, 1>, scalar_prefetch = 0 : i64, scratch_operands = 2 : i64, tpu.core_type = #tpu.core_type<tc>, window_params = [{transform_indices = @transform_0, window_bounds = array<i64: 16, 128>}, {pipeline_mode = #tpu.pipeline_mode<synchronous>, transform_indices = @transform_1, window_bounds = array<i64: 128, 128>}, {pipeline_mode = #tpu.pipeline_mode<synchronous>, transform_indices = @transform_2, window_bounds = array<i64: 1, 128>}, {pipeline_mode = #tpu.pipeline_mode<synchronous>, transform_indices = @transform_3, window_bounds = array<i64: 128, 128>}, {pipeline_mode = #tpu.pipeline_mode<synchronous>, transform_indices = @transform_4, window_bounds = array<i64: 1, 128>}, {transform_indices = @transform_5, window_bounds = array<i64: 16, 128>}]} {
    %c0_i32 = arith.constant 0 : i32
    %0 = arith.cmpi eq, %arg1, %c0_i32 : i32
    %1 = arith.extui %0 : i1 to i32
    %c0_i32_0 = arith.constant 0 : i32
    %2 = arith.cmpi ne, %1, %c0_i32_0 : i32
    scf.if %2 {
      %c0_18 = arith.constant 0 : index
      %c0_19 = arith.constant 0 : index
      %26 = vector.load %arg2[%c0_18, %c0_19] : memref<16x128xf32, #tpu.memory_space<vmem>>, vector<16x128xf32>
      %cst_20 = arith.constant dense<0.000000e+00> : vector<16xf32>
      %27 = vector.multi_reduction <add>, %26, %cst_20 [1] : vector<16x128xf32> to vector<16xf32>
      %28 = vector.shape_cast %27 : vector<16xf32> to vector<16x1xf32>
      %cst_21 = arith.constant 3.125000e-02 : f32
      %29 = vector.broadcast %cst_21 : f32 to vector<16x1xf32>
      %30 = arith.mulf %28, %29 : vector<16x1xf32>
      %31 = vector.broadcast %30 : vector<16x1xf32> to vector<16x128xf32>
      %32 = arith.subf %26, %31 : vector<16x128xf32>
      %33 = arith.mulf %32, %32 : vector<16x128xf32>
      %cst_22 = arith.constant dense<0.000000e+00> : vector<16xf32>
      %34 = vector.multi_reduction <add>, %33, %cst_22 [1] : vector<16x128xf32> to vector<16xf32>
      %35 = vector.shape_cast %34 : vector<16xf32> to vector<16x1xf32>
      %36 = arith.mulf %30, %30 : vector<16x1xf32>
      %cst_23 = arith.constant 9.600000e+01 : f32
      %37 = vector.broadcast %cst_23 : f32 to vector<16x1xf32>
      %38 = arith.mulf %37, %36 : vector<16x1xf32>
      %39 = arith.subf %35, %38 : vector<16x1xf32>
      %cst_24 = arith.constant 3.125000e-02 : f32
      %40 = vector.broadcast %cst_24 : f32 to vector<16x1xf32>
      %41 = arith.mulf %39, %40 : vector<16x1xf32>
      %cst_25 = arith.constant 9.99999974E-6 : f32
      %42 = vector.broadcast %cst_25 : f32 to vector<16x1xf32>
      %43 = arith.addf %41, %42 : vector<16x1xf32>
      %44 = math.rsqrt %43 : vector<16x1xf32>
      %45 = vector.broadcast %44 : vector<16x1xf32> to vector<16x128xf32>
      %46 = arith.mulf %32, %45 : vector<16x128xf32>
      %47 = arith.truncf %46 : vector<16x128xf32> to vector<16x128xbf16>
      %c0_26 = arith.constant 0 : index
      %c0_27 = arith.constant 0 : index
      %48 = vector.load %arg8[%c0_26, %c0_27] : memref<16x128xbf16, #tpu.memory_space<vmem>>, vector<16x128xbf16>
      tpu.vector_store %arg8[%c0_26, %c0_27], %47 {strides = array<i32>} : memref<16x128xbf16, #tpu.memory_space<vmem>>, vector<16x128xbf16>,
      %cst_28 = arith.constant 0.000000e+00 : f32
      %49 = vector.broadcast %cst_28 : f32 to vector<16x128xf32>
      %c0_29 = arith.constant 0 : index
      %c0_30 = arith.constant 0 : index
      %50 = vector.load %arg9[%c0_29, %c0_30] : memref<16x128xf32, #tpu.memory_space<vmem>>, vector<16x128xf32>
      tpu.vector_store %arg9[%c0_29, %c0_30], %49 {strides = array<i32>} : memref<16x128xf32, #tpu.memory_space<vmem>>, vector<16x128xf32>,
    } else {
    }
    %c0 = arith.constant 0 : index
    %c0_1 = arith.constant 0 : index
    %3 = vector.load %arg8[%c0, %c0_1] : memref<16x128xbf16, #tpu.memory_space<vmem>>, vector<16x128xbf16>
    %c0_2 = arith.constant 0 : index
    %c0_3 = arith.constant 0 : index
    %4 = vector.load %arg3[%c0_2, %c0_3] : memref<128x128xbf16, #tpu.memory_space<vmem>>, vector<128x128xbf16>
    %cst = arith.constant dense<0.000000e+00> : vector<16x128xf32>
    %5 = tpu.matmul %3, %4, %cst {dimension_numbers = #tpu.dot_dimension_numbers<[1], [0], [0], [1], [0, 0, 1, 1], [], []>} : vector<16x128xbf16>, vector<128x128xbf16>, vector<16x128xf32> -> vector<16x128xf32>
    %c0_4 = arith.constant 0 : index
    %c0_5 = arith.constant 0 : index
    %6 = vector.load %arg4[%c0_4, %c0_5] : memref<1x128xf32, #tpu.memory_space<vmem>>, vector<1x128xf32>
    %7 = vector.broadcast %6 : vector<1x128xf32> to vector<16x128xf32>
    %8 = arith.addf %5, %7 : vector<16x128xf32>
    %cst_6 = arith.constant 5.000000e-01 : f32
    %9 = vector.broadcast %cst_6 : f32 to vector<16x128xf32>
    %10 = arith.mulf %9, %8 : vector<16x128xf32>
    %cst_7 = arith.constant 0.707106769 : f32
    %11 = vector.broadcast %cst_7 : f32 to vector<16x128xf32>
    %12 = arith.mulf %8, %11 : vector<16x128xf32>
    %13 = math.erf %12 : vector<16x128xf32>
    %cst_8 = arith.constant 1.000000e+00 : f32
    %14 = vector.broadcast %cst_8 : f32 to vector<16x128xf32>
    %15 = arith.addf %14, %13 : vector<16x128xf32>
    %16 = arith.mulf %10, %15 : vector<16x128xf32>
    %c0_9 = arith.constant 0 : index
    %c0_10 = arith.constant 0 : index
    %17 = vector.load %arg9[%c0_9, %c0_10] : memref<16x128xf32, #tpu.memory_space<vmem>>, vector<16x128xf32>
    %18 = arith.truncf %16 : vector<16x128xf32> to vector<16x128xbf16>
    %c0_11 = arith.constant 0 : index
    %c0_12 = arith.constant 0 : index
    %19 = vector.load %arg5[%c0_11, %c0_12] : memref<128x128xbf16, #tpu.memory_space<vmem>>, vector<128x128xbf16>
    %cst_13 = arith.constant dense<0.000000e+00> : vector<16x128xf32>
    %20 = tpu.matmul %18, %19, %cst_13 {dimension_numbers = #tpu.dot_dimension_numbers<[1], [0], [0], [1], [0, 0, 1, 1], [], []>} : vector<16x128xbf16>, vector<128x128xbf16>, vector<16x128xf32> -> vector<16x128xf32>
    %21 = arith.addf %17, %20 : vector<16x128xf32>
    %c0_14 = arith.constant 0 : index
    %c0_15 = arith.constant 0 : index
    %22 = vector.load %arg9[%c0_14, %c0_15] : memref<16x128xf32, #tpu.memory_space<vmem>>, vector<16x128xf32>
    tpu.vector_store %arg9[%c0_14, %c0_15], %21 {strides = array<i32>} : memref<16x128xf32, #tpu.memory_space<vmem>>, vector<16x128xf32>,
    %c0_i32_16 = arith.constant 0 : i32
    %23 = arith.cmpi eq, %arg1, %c0_i32_16 : i32
    %24 = arith.extui %23 : i1 to i32
    %c0_i32_17 = arith.constant 0 : i32
    %25 = arith.cmpi ne, %24, %c0_i32_17 : i32
    scf.if %25 {
      %c0_18 = arith.constant 0 : index
      %c0_19 = arith.constant 0 : index
      %26 = vector.load %arg9[%c0_18, %c0_19] : memref<16x128xf32, #tpu.memory_space<vmem>>, vector<16x128xf32>
      %c0_20 = arith.constant 0 : index
      %c0_21 = arith.constant 0 : index
      %27 = vector.load %arg6[%c0_20, %c0_21] : memref<1x128xf32, #tpu.memory_space<vmem>>, vector<1x128xf32>
      %28 = vector.broadcast %27 : vector<1x128xf32> to vector<16x128xf32>
      %29 = arith.addf %26, %28 : vector<16x128xf32>
      %c0_22 = arith.constant 0 : index
      %c0_23 = arith.constant 0 : index
      %30 = vector.load %arg7[%c0_22, %c0_23] : memref<16x128xf32, #tpu.memory_space<vmem>>, vector<16x128xf32>
      tpu.vector_store %arg7[%c0_22, %c0_23], %29 {strides = array<i32>} : memref<16x128xf32, #tpu.memory_space<vmem>>, vector<16x128xf32>,
    } else {
    }
    return
  }
  func.func @transform_0(%arg0: i32, %arg1: i32) -> (i32, i32) {
    %c0_i32 = arith.constant 0 : i32
    %c0_i32_0 = arith.constant 0 : i32
    return %arg0, %c0_i32 : i32, i32
  }
  func.func @transform_1(%arg0: i32, %arg1: i32) -> (i32, i32) {
    %c0_i32 = arith.constant 0 : i32
    %c0_i32_0 = arith.constant 0 : i32
    return %c0_i32, %arg1 : i32, i32
  }
  func.func @transform_2(%arg0: i32, %arg1: i32) -> (i32, i32) {
    %c0_i32 = arith.constant 0 : i32
    %c0_i32_0 = arith.constant 0 : i32
    return %c0_i32, %arg1 : i32, i32
  }
  func.func @transform_3(%arg0: i32, %arg1: i32) -> (i32, i32) {
    %c0_i32 = arith.constant 0 : i32
    %c0_i32_0 = arith.constant 0 : i32
    return %arg1, %c0_i32 : i32, i32
  }
  func.func @transform_4(%arg0: i32, %arg1: i32) -> (i32, i32) {
    %c0_i32 = arith.constant 0 : i32
    %c0_i32_0 = arith.constant 0 : i32
    %c0_i32_1 = arith.constant 0 : i32
    return %c0_i32, %c0_i32_0 : i32, i32
  }
  func.func @transform_5(%arg0: i32, %arg1: i32) -> (i32, i32) {
    %c0_i32 = arith.constant 0 : i32
    %c0_i32_0 = arith.constant 0 : i32
    return %arg0, %c0_i32 : i32, i32
  }
}

module attributes {stable_mosaic.version = 11 : i64} {
  func.func @_prenorm_ff_kernel(%arg0: i32, %arg1: i32, %arg2: memref<16x128xf32, #tpu.memory_space<vmem>>, %arg3: memref<128x128xbf16, #tpu.memory_space<vmem>>, %arg4: memref<1x128xf32, #tpu.memory_space<vmem>>, %arg5: memref<128x128xbf16, #tpu.memory_space<vmem>>, %arg6: memref<1x128xf32, #tpu.memory_space<vmem>>, %arg7: memref<16x128xf32, #tpu.memory_space<vmem>>, %arg8: memref<16x128xbf16, #tpu.memory_space<vmem>>, %arg9: memref<16x128xf32, #tpu.memory_space<vmem>>) attributes {dimension_semantics = [#tpu.dimension_semantics<parallel>, #tpu.dimension_semantics<arbitrary>], iteration_bounds = array<i64: 1, 1>, scalar_prefetch = 0 : i64, scratch_operands = 2 : i64, tpu.core_type = #tpu.core_type<tc>, window_params = [{transform_indices = @transform_0, window_bounds = array<i64: 16, 128>}, {transform_indices = @transform_1, window_bounds = array<i64: 128, 128>}, {transform_indices = @transform_2, window_bounds = array<i64: 1, 128>}, {transform_indices = @transform_3, window_bounds = array<i64: 128, 128>}, {pipeline_mode = #tpu.pipeline_mode<synchronous>, transform_indices = @transform_4, window_bounds = array<i64: 1, 128>}, {transform_indices = @transform_5, window_bounds = array<i64: 16, 128>}]} {
    %c0_i32 = arith.constant 0 : i32
    %0 = arith.cmpi eq, %arg1, %c0_i32 : i32
    %1 = arith.extui %0 : i1 to i32
    %c0_i32_0 = arith.constant 0 : i32
    %2 = arith.cmpi ne, %1, %c0_i32_0 : i32
    scf.if %2 {
      %c0_18 = arith.constant 0 : index
      %c0_19 = arith.constant 0 : index
      %26 = vector.load %arg2[%c0_18, %c0_19] : memref<16x128xf32, #tpu.memory_space<vmem>>, vector<16x128xf32>
      %cst_20 = arith.constant dense<0.000000e+00> : vector<16xf32>
      %27 = vector.multi_reduction <add>, %26, %cst_20 [1] : vector<16x128xf32> to vector<16xf32>
      %28 = vector.shape_cast %27 : vector<16xf32> to vector<16x1xf32>
      %cst_21 = arith.constant 3.125000e-02 : f32
      %29 = vector.broadcast %cst_21 : f32 to vector<16x1xf32>
      %30 = arith.mulf %28, %29 : vector<16x1xf32>
      %31 = vector.broadcast %30 : vector<16x1xf32> to vector<16x128xf32>
      %32 = arith.subf %26, %31 : vector<16x128xf32>
      %33 = arith.mulf %32, %32 : vector<16x128xf32>
      %cst_22 = arith.constant dense<0.000000e+00> : vector<16xf32>
      %34 = vector.multi_reduction <add>, %33, %cst_22 [1] : vector<16x128xf32> to vector<16xf32>
      %35 = vector.shape_cast %34 : vector<16xf32> to vector<16x1xf32>
      %36 = arith.mulf %30, %30 : vector<16x1xf32>
      %cst_23 = arith.constant 9.600000e+01 : f32
      %37 = vector.broadcast %cst_23 : f32 to vector<16x1xf32>
      %38 = arith.mulf %37, %36 : vector<16x1xf32>
      %39 = arith.subf %35, %38 : vector<16x1xf32>
      %cst_24 = arith.constant 3.125000e-02 : f32
      %40 = vector.broadcast %cst_24 : f32 to vector<16x1xf32>
      %41 = arith.mulf %39, %40 : vector<16x1xf32>
      %cst_25 = arith.constant 9.99999974E-6 : f32
      %42 = vector.broadcast %cst_25 : f32 to vector<16x1xf32>
      %43 = arith.addf %41, %42 : vector<16x1xf32>
      %44 = math.rsqrt %43 : vector<16x1xf32>
      %45 = vector.broadcast %44 : vector<16x1xf32> to vector<16x128xf32>
      %46 = arith.mulf %32, %45 : vector<16x128xf32>
      %47 = arith.truncf %46 : vector<16x128xf32> to vector<16x128xbf16>
      %c0_26 = arith.constant 0 : index
      %c0_27 = arith.constant 0 : index
      %48 = vector.load %arg8[%c0_26, %c0_27] : memref<16x128xbf16, #tpu.memory_space<vmem>>, vector<16x128xbf16>
      tpu.vector_store %arg8[%c0_26, %c0_27], %47 {strides = array<i32>} : memref<16x128xbf16, #tpu.memory_space<vmem>>, vector<16x128xbf16>,
      %cst_28 = arith.constant 0.000000e+00 : f32
      %49 = vector.broadcast %cst_28 : f32 to vector<16x128xf32>
      %c0_29 = arith.constant 0 : index
      %c0_30 = arith.constant 0 : index
      %50 = vector.load %arg9[%c0_29, %c0_30] : memref<16x128xf32, #tpu.memory_space<vmem>>, vector<16x128xf32>
      tpu.vector_store %arg9[%c0_29, %c0_30], %49 {strides = array<i32>} : memref<16x128xf32, #tpu.memory_space<vmem>>, vector<16x128xf32>,
    } else {
    }
    %c0 = arith.constant 0 : index
    %c0_1 = arith.constant 0 : index
    %3 = vector.load %arg8[%c0, %c0_1] : memref<16x128xbf16, #tpu.memory_space<vmem>>, vector<16x128xbf16>
    %c0_2 = arith.constant 0 : index
    %c0_3 = arith.constant 0 : index
    %4 = vector.load %arg3[%c0_2, %c0_3] : memref<128x128xbf16, #tpu.memory_space<vmem>>, vector<128x128xbf16>
    %cst = arith.constant dense<0.000000e+00> : vector<16x128xf32>
    %5 = tpu.matmul %3, %4, %cst {dimension_numbers = #tpu.dot_dimension_numbers<[1], [0], [0], [1], [0, 0, 1, 1], [], []>} : vector<16x128xbf16>, vector<128x128xbf16>, vector<16x128xf32> -> vector<16x128xf32>
    %c0_4 = arith.constant 0 : index
    %c0_5 = arith.constant 0 : index
    %6 = vector.load %arg4[%c0_4, %c0_5] : memref<1x128xf32, #tpu.memory_space<vmem>>, vector<1x128xf32>
    %7 = vector.broadcast %6 : vector<1x128xf32> to vector<16x128xf32>
    %8 = arith.addf %5, %7 : vector<16x128xf32>
    %cst_6 = arith.constant 5.000000e-01 : f32
    %9 = vector.broadcast %cst_6 : f32 to vector<16x128xf32>
    %10 = arith.mulf %9, %8 : vector<16x128xf32>
    %cst_7 = arith.constant 0.707106769 : f32
    %11 = vector.broadcast %cst_7 : f32 to vector<16x128xf32>
    %12 = arith.mulf %8, %11 : vector<16x128xf32>
    %13 = math.erf %12 : vector<16x128xf32>
    %cst_8 = arith.constant 1.000000e+00 : f32
    %14 = vector.broadcast %cst_8 : f32 to vector<16x128xf32>
    %15 = arith.addf %14, %13 : vector<16x128xf32>
    %16 = arith.mulf %10, %15 : vector<16x128xf32>
    %c0_9 = arith.constant 0 : index
    %c0_10 = arith.constant 0 : index
    %17 = vector.load %arg9[%c0_9, %c0_10] : memref<16x128xf32, #tpu.memory_space<vmem>>, vector<16x128xf32>
    %18 = arith.truncf %16 : vector<16x128xf32> to vector<16x128xbf16>
    %c0_11 = arith.constant 0 : index
    %c0_12 = arith.constant 0 : index
    %19 = vector.load %arg5[%c0_11, %c0_12] : memref<128x128xbf16, #tpu.memory_space<vmem>>, vector<128x128xbf16>
    %cst_13 = arith.constant dense<0.000000e+00> : vector<16x128xf32>
    %20 = tpu.matmul %18, %19, %cst_13 {dimension_numbers = #tpu.dot_dimension_numbers<[1], [0], [0], [1], [0, 0, 1, 1], [], []>} : vector<16x128xbf16>, vector<128x128xbf16>, vector<16x128xf32> -> vector<16x128xf32>
    %21 = arith.addf %17, %20 : vector<16x128xf32>
    %c0_14 = arith.constant 0 : index
    %c0_15 = arith.constant 0 : index
    %22 = vector.load %arg9[%c0_14, %c0_15] : memref<16x128xf32, #tpu.memory_space<vmem>>, vector<16x128xf32>
    tpu.vector_store %arg9[%c0_14, %c0_15], %21 {strides = array<i32>} : memref<16x128xf32, #tpu.memory_space<vmem>>, vector<16x128xf32>,
    %c0_i32_16 = arith.constant 0 : i32
    %23 = arith.cmpi eq, %arg1, %c0_i32_16 : i32
    %24 = arith.extui %23 : i1 to i32
    %c0_i32_17 = arith.constant 0 : i32
    %25 = arith.cmpi ne, %24, %c0_i32_17 : i32
    scf.if %25 {
      %c0_18 = arith.constant 0 : index
      %c0_19 = arith.constant 0 : index
      %26 = vector.load %arg9[%c0_18, %c0_19] : memref<16x128xf32, #tpu.memory_space<vmem>>, vector<16x128xf32>
      %c0_20 = arith.constant 0 : index
      %c0_21 = arith.constant 0 : index
      %27 = vector.load %arg6[%c0_20, %c0_21] : memref<1x128xf32, #tpu.memory_space<vmem>>, vector<1x128xf32>
      %28 = vector.broadcast %27 : vector<1x128xf32> to vector<16x128xf32>
      %29 = arith.addf %26, %28 : vector<16x128xf32>
      %c0_22 = arith.constant 0 : index
      %c0_23 = arith.constant 0 : index
      %30 = vector.load %arg7[%c0_22, %c0_23] : memref<16x128xf32, #tpu.memory_space<vmem>>, vector<16x128xf32>
      tpu.vector_store %arg7[%c0_22, %c0_23], %29 {strides = array<i32>} : memref<16x128xf32, #tpu.memory_space<vmem>>, vector<16x128xf32>,
    } else {
    }
    return
  }
  func.func @transform_0(%arg0: i32, %arg1: i32) -> (i32, i32) {
    %c0_i32 = arith.constant 0 : i32
    %c0_i32_0 = arith.constant 0 : i32
    return %arg0, %c0_i32 : i32, i32
  }
  func.func @transform_1(%arg0: i32, %arg1: i32) -> (i32, i32) {
    %c0_i32 = arith.constant 0 : i32
    %c0_i32_0 = arith.constant 0 : i32
    return %c0_i32, %arg1 : i32, i32
  }
  func.func @transform_2(%arg0: i32, %arg1: i32) -> (i32, i32) {
    %c0_i32 = arith.constant 0 : i32
    %c0_i32_0 = arith.constant 0 : i32
    return %c0_i32, %arg1 : i32, i32
  }
  func.func @transform_3(%arg0: i32, %arg1: i32) -> (i32, i32) {
    %c0_i32 = arith.constant 0 : i32
    %c0_i32_0 = arith.constant 0 : i32
    return %arg1, %c0_i32 : i32, i32
  }
  func.func @transform_4(%arg0: i32, %arg1: i32) -> (i32, i32) {
    %c0_i32 = arith.constant 0 : i32
    %c0_i32_0 = arith.constant 0 : i32
    %c0_i32_1 = arith.constant 0 : i32
    return %c0_i32, %c0_i32_0 : i32, i32
  }
  func.func @transform_5(%arg0: i32, %arg1: i32) -> (i32, i32) {
    %c0_i32 = arith.constant 0 : i32
    %c0_i32_0 = arith.constant 0 : i32
    return %arg0, %c0_i32 : i32, i32
  }
}

</mosaic_0001>

<llo_original>
// kernel: tpu_custom_call.1
$region0: #{tpu_custom_call.1}
  #allocation0 [shape = 'u32[]', space=smem, size = 0x4, offset = 0x4, fixed_abs, tag = 'smem constant byte address 0x4 - core index']
  #allocation1 [shape = 'u32[144,128]{1,0:T(1,128)}', space=vmem, size = 0x12000, scoped, tag = 'internal scratch']
  #allocation2 [shape = 'bf16[16,128]{1,0:T(16,128)(2,1)}', space=vmem, size = 0x1000, scoped, tag = 'scratch operand']
  #allocation3 [shape = 'f32[16,128]{1,0:T(8,128)}', space=vmem, size = 0x2000, scoped, tag = 'scratch operand']
  %s0 = inlined_call_operand.hbm [shape: f32[16,128], index: 0, kind: input, shape index: {}]
  %s1 = inlined_call_operand.hbm [shape: bf16[128,128], index: 1, kind: input, shape index: {}]
  %s2 = inlined_call_operand.vmem [shape: f32[1,128], index: 2, kind: input, shape index: {}]
  %s3 = inlined_call_operand.hbm [shape: bf16[128,128], index: 3, kind: input, shape index: {}]
  %s4 = inlined_call_operand.vmem [shape: f32[1,128], index: 4, kind: input, shape index: {}]
  %s5 = inlined_call_operand.hbm [shape: f32[16,128], index: 5, kind: output, shape index: {}]
  %s6 = sld [smem:[#allocation0]]
  $region50: #{tpu_custom_call.1} parent=0
    _
  %s8 = ssub.s32 1, %s6
  %s9 = scalar_select 0, %s8, %s6
  $region1: #{tpu_custom_call.1} parent=0
    #allocation4 [shape = 'u8[8192]{0}', space=vmem, size = 0x2000, scoped, tag = 'input window, operand 0, single buffered']
    #allocation5 [shape = 's32[1]{0}', space=sflag, size = 0x4, scoped, tag = 'scoped memory for tpu_custom_call.1']
    #allocation6 [shape = 's32[1]{0}', space=sflag, size = 0x4, scoped, tag = 'scoped memory for tpu_custom_call.1']
    #allocation7 [shape = 'u8[32768]{0}', space=vmem, size = 0x8000, scoped, tag = 'input window, operand 1, single buffered']
    #allocation8 [shape = 's32[1]{0}', space=sflag, size = 0x4, scoped, tag = 'scoped memory for tpu_custom_call.1']
    #allocation9 [shape = 'u8[32768]{0}', space=vmem, size = 0x8000, scoped, tag = 'input window, operand 3, single buffered']
    #allocation10 [shape = 'u8[8192]{0}', space=vmem, size = 0x2000, scoped, tag = 'output window, operand 0, single buffered']
    %10 = vsyncpa [#allocation5], 0
    %11 = vsyncpa [#allocation8], 0
    %12 = vsyncpa [#allocation6], 0
    // Predicated region
    $region2: #{tpu_custom_call.1} parent=1 // pred_check
      _
    $region3: #{tpu_custom_call.1} parent=1 // pred_check_branch
      %14 = sbr.rel (0) target = $region5
    $region4: #{tpu_custom_call.1} parent=1 // pred_region
      %s16 = ssub.s32 256, 256
      %17 = vsyncadd [#allocation5], %s16
      %s18 = sshll.u32 [#allocation4], 4
      %s19 = int_to_ptr.vmem [resolvable:$true] %s18
      %24 = dma.hbm_to_vmem [thread:$0]  %s0, 256, %s19, [#allocation5], 128, 128, 8
    $region5: #{tpu_custom_call.1} parent=1 // pred_fallthru
      _
    // Predicated region
    $region6: #{tpu_custom_call.1} parent=1 // pred_check
      _
    $region7: #{tpu_custom_call.1} parent=1 // pred_check_branch
      %26 = sbr.rel (0) target = $region9
    $region8: #{tpu_custom_call.1} parent=1 // pred_region
      %s28 = ssub.s32 1024, 1024
      %29 = vsyncadd [#allocation8], %s28
      %s30 = sshll.u32 [#allocation7], 4
      %s31 = int_to_ptr.vmem [resolvable:$true] %s30
      %36 = dma.hbm_to_vmem [thread:$0]  %s1, 1024, %s31, [#allocation8], 64, 64, 4
    $region9: #{tpu_custom_call.1} parent=1 // pred_fallthru
      _
    // Predicated region
    $region10: #{tpu_custom_call.1} parent=1 // pred_check
      _
    $region11: #{tpu_custom_call.1} parent=1 // pred_check_branch
      %38 = sbr.rel (0) target = $region13
    $region12: #{tpu_custom_call.1} parent=1 // pred_region
      _
    $region13: #{tpu_custom_call.1} parent=1 // pred_fallthru
      _
    // Predicated region
    $region14: #{tpu_custom_call.1} parent=1 // pred_check
      _
    $region15: #{tpu_custom_call.1} parent=1 // pred_check_branch
      %40 = sbr.rel (0) target = $region17
    $region16: #{tpu_custom_call.1} parent=1 // pred_region
      %s42 = ssub.s32 1024, 1024
      %43 = vsyncadd [#allocation8], %s42
      %s44 = sshll.u32 [#allocation9], 4
      %s45 = int_to_ptr.vmem [resolvable:$true] %s44
      %50 = dma.hbm_to_vmem [thread:$0]  %s3, 1024, %s45, [#allocation8], 64, 64, 4
    $region17: #{tpu_custom_call.1} parent=1 // pred_fallthru
      _
    // Predicated region
    $region18: #{tpu_custom_call.1} parent=1 // pred_check
      _
    $region19: #{tpu_custom_call.1} parent=1 // pred_check_branch
      %52 = sbr.rel (0) target = $region21
    $region20: #{tpu_custom_call.1} parent=1 // pred_region
      _
    $region21: #{tpu_custom_call.1} parent=1 // pred_fallthru
      _
    // Predicated region
    $region22: #{tpu_custom_call.1} parent=1 // pred_check
      _
    $region23: #{tpu_custom_call.1} parent=1 // pred_check_branch
      %54 = sbr.rel (0) target = $region25
    $region24: #{tpu_custom_call.1} parent=1 // pred_region
      %55 = dma.done [#allocation5], 256
    $region25: #{tpu_custom_call.1} parent=1 // pred_fallthru
      _
    // Predicated region
    $region26: #{tpu_custom_call.1} parent=1 // pred_check
      _
    $region27: #{tpu_custom_call.1} parent=1 // pred_check_branch
      %57 = sbr.rel (0) target = $region29
    $region28: #{tpu_custom_call.1} parent=1 // pred_region
      %58 = dma.done [#allocation8], 1024
    $region29: #{tpu_custom_call.1} parent=1 // pred_fallthru
      _
    // Predicated region
    $region30: #{tpu_custom_call.1} parent=1 // pred_check
      _
    $region31: #{tpu_custom_call.1} parent=1 // pred_check_branch
      %60 = sbr.rel (0) target = $region33
    $region32: #{tpu_custom_call.1} parent=1 // pred_region
      %61 = dma.done [#allocation8], 1024
    $region33: #{tpu_custom_call.1} parent=1 // pred_fallthru
      _
    %p63 = scmp.eq.s32.totalorder 0, 0
    // Predicated region
    $region34: #{tpu_custom_call.1} parent=1 // pred_check
      %p64 = pneg %p63
    $region35: #{tpu_custom_call.1} parent=1 // pred_check_branch
      %66 = sbr.rel (%p64) target = $region37
    $region36: #{tpu_custom_call.1} parent=1 // pred_region
      %v67 = vld [vmem:[#allocation4] sm:$0xff]
      %v68 = vld [vmem:[#allocation4 + $0x8] sm:$0xff]
      %69 = vadd.xlane.f32.xlu0 %v67
      %v70 = vpop.xlane.xlu0 %69
      %71 = vadd.xlane.f32.xlu0 %v68
      %v72 = vpop.xlane.xlu0 %71
      %v73 = vmul.f32 %v70, 0.03125
      %v74 = vmul.f32 %v72, 0.03125
      %v75 = vsub.f32 %v67, %v73
      %v76 = vsub.f32 %v68, %v74
      %v77 = vmul.f32 %v75, %v75
      %v78 = vmul.f32 %v76, %v76
      %79 = vadd.xlane.f32.xlu0 %v77
      %v80 = vpop.xlane.xlu0 %79
      %81 = vadd.xlane.f32.xlu0 %v78
      %v82 = vpop.xlane.xlu0 %81
      %v83 = vmul.f32 %v73, %v73
      %v84 = vmul.f32 %v74, %v74
      %v85 = vmul.f32 %v83, 96.0
      %v86 = vmul.f32 %v84, 96.0
      %v87 = vsub.f32 %v80, %v85
      %v88 = vsub.f32 %v82, %v86
      %v89 = vmul.f32 %v87, 0.03125
      %v90 = vmul.f32 %v88, 0.03125
      %v91 = vadd.f32 %v89, 1e-05
      %v92 = vadd.f32 %v90, 1e-05
      %v93 = vrsqrt.pop %v91
      %v94 = vrsqrt.pop %v92
      %v95 = vmul.f32 %v75, %v93
      %v96 = vmul.f32 %v76, %v94
      %v97 = vpack.c.bf16 %v96, %v95
      %98 = vst [vmem:[#allocation2] sm:$0xff] %v97
      %99 = vst [vmem:[#allocation3] sm:$0xff] 0.0
      %100 = vst [vmem:[#allocation3 + $0x8] sm:$0xff] 0.0
    $region37: #{tpu_custom_call.1} parent=1 // pred_fallthru
      _
    %v101 = vld [vmem:[#allocation2] sm:$0xff]
    %v102 = vld [vmem:[#allocation7] sm:$0xf]
    %v103 = vld [vmem:[#allocation7 + $0x4] sm:$0xf]
    %v104 = vld [vmem:[#allocation7 + $0x8] sm:$0xf]
    %v105 = vld [vmem:[#allocation7 + $0xc] sm:$0xf]
    %v106 = vld [vmem:[#allocation7 + $0x10] sm:$0xf]
    %v107 = vld [vmem:[#allocation7 + $0x14] sm:$0xf]
    %v108 = vld [vmem:[#allocation7 + $0x18] sm:$0xf]
    %v109 = vld [vmem:[#allocation7 + $0x1c] sm:$0xf]
    %v110 = vld [vmem:[#allocation7 + $0x20] sm:$0xf]
    %v111 = vld [vmem:[#allocation7 + $0x24] sm:$0xf]
    %v112 = vld [vmem:[#allocation7 + $0x28] sm:$0xf]
    %v113 = vld [vmem:[#allocation7 + $0x2c] sm:$0xf]
    %v114 = vld [vmem:[#allocation7 + $0x30] sm:$0xf]
    %v115 = vld [vmem:[#allocation7 + $0x34] sm:$0xf]
    %v116 = vld [vmem:[#allocation7 + $0x38] sm:$0xf]
    %v117 = vld [vmem:[#allocation7 + $0x3c] sm:$0xf]
    %v118 = vld [vmem:[%s2] sm:$0x1]
    %v120 = vlaneseq
    %v121 = vshrl.u32 %v120, 7
    %v122 = vsub.s32 0, %v121
    %v123 = vrot.slane %v118, %v122
    %v141 = vunpack.c.l.b16 %v102
    %v142 = vunpack.c.l.b16 %v103
    %v143 = vunpack.c.l.b16 %v104
    %v144 = vunpack.c.l.b16 %v105
    %v145 = vunpack.c.l.b16 %v106
    %v146 = vunpack.c.l.b16 %v107
    %v147 = vunpack.c.l.b16 %v108
    %v148 = vunpack.c.l.b16 %v109
    %v149 = vunpack.c.l.b16 %v110
    %v150 = vunpack.c.l.b16 %v111
    %v151 = vunpack.c.l.b16 %v112
    %v152 = vunpack.c.l.b16 %v113
    %v153 = vunpack.c.l.b16 %v114
    %v154 = vunpack.c.l.b16 %v115
    %v155 = vunpack.c.l.b16 %v116
    %v156 = vunpack.c.l.b16 %v117
    %v157 = vpack.c.b16 %v142, %v141
    %v158 = vpack.c.b16 %v144, %v143
    %v159 = vpack.c.b16 %v146, %v145
    %v160 = vpack.c.b16 %v148, %v147
    %v161 = vpack.c.b16 %v150, %v149
    %v162 = vpack.c.b16 %v152, %v151
    %v163 = vpack.c.b16 %v154, %v153
    %v164 = vpack.c.b16 %v156, %v155
    %173 = vmatprep.subr.bf16.mxu0 0
    %174 = vmatpush1.bf16.msra.mxu0 %v157
    %175 = vmatprep.subr.bf16.mxu0 0
    %176 = vmatpush1.bf16.msra.mxu0 %v158
    %177 = vmatprep.subr.bf16.mxu0 0
    %178 = vmatpush1.bf16.msra.mxu0 %v159
    %179 = vmatprep.subr.bf16.mxu0 0
    %180 = vmatpush1.bf16.msra.mxu0 %v160
    %181 = vmatprep.subr.bf16.mxu0 0
    %182 = vmatpush1.bf16.msra.mxu0 %v161
    %183 = vmatprep.subr.bf16.mxu0 0
    %184 = vmatpush1.bf16.msra.mxu0 %v162
    %185 = vmatprep.subr.bf16.mxu0 0
    %186 = vmatpush1.bf16.msra.mxu0 %v163
    %187 = vmatprep.subr.bf16.mxu0 0
    %188 = vmatpush1.bf16.msra.mxu0 %v164
    %189 = vmatprep.subr.bf16.mxu0 0
    %190 = vmatpush1.bf16.msra.mxu0 0
    %191 = vmatprep.subr.bf16.mxu0 0
    %192 = vmatpush1.bf16.msra.mxu0 0
    %193 = vmatprep.subr.bf16.mxu0 0
    %194 = vmatpush1.bf16.msra.mxu0 0
    %195 = vmatprep.subr.bf16.mxu0 0
    %196 = vmatpush1.bf16.msra.mxu0 0
    %197 = vmatprep.subr.bf16.mxu0 0
    %198 = vmatpush1.bf16.msra.mxu0 0
    %199 = vmatprep.subr.bf16.mxu0 0
    %200 = vmatpush1.bf16.msra.mxu0 0
    %201 = vmatprep.subr.bf16.mxu0 0
    %202 = vmatpush1.bf16.msra.mxu0 0
    %203 = vmatprep.subr.bf16.mxu0 0
    %204 = vmatpush1.bf16.msra.mxu0 0
    %205 = vmatprep.mubr.bf16.mxu0 0
    %206 = vmatmul.mubr.bf16.gmra.mrb[0].mxu0 %v101
    %v207 = vpop.f32.mrb[0].mxu0
    %v208 = vadd.f32 %v123, %v207
    %v209 = vpop.f32.mrb[0].mxu0
    %v210 = vpop.f32.mrb[0].mxu0
    %v211 = vadd.f32 %v123, %v210
    %v212 = vpop.f32.mrb[0].mxu0
    %213 = vdwg.mxu0
    %v214 = vmul.f32 %v208, 0.5
    %v215 = vmul.f32 %v211, 0.5
    %v216 = vmul.f32 %v208, 0.70710677
    %v217 = vmul.f32 %v211, 0.70710677
    %v218 = verf.f32.pop %v216
    %v219 = verf.f32.pop %v217
    %v220 = vadd.f32 %v218, 1.0
    %v221 = vadd.f32 %v219, 1.0
    %v222 = vmul.f32 %v214, %v220
    %v223 = vmul.f32 %v215, %v221
    %v224 = vld [vmem:[#allocation3] sm:$0xff]
    %v225 = vld [vmem:[#allocation3 + $0x8] sm:$0xff]
    %v226 = vpack.c.bf16 %v223, %v222
    %v227 = vld [vmem:[#allocation9] sm:$0xf]
    %v228 = vld [vmem:[#allocation9 + $0x4] sm:$0xf]
    %v229 = vld [vmem:[#allocation9 + $0x8] sm:$0xf]
    %v230 = vld [vmem:[#allocation9 + $0xc] sm:$0xf]
    %v231 = vld [vmem:[#allocation9 + $0x10] sm:$0xf]
    %v232 = vld [vmem:[#allocation9 + $0x14] sm:$0xf]
    %v233 = vld [vmem:[#allocation9 + $0x18] sm:$0xf]
    %v234 = vld [vmem:[#allocation9 + $0x1c] sm:$0xf]
    %v235 = vld [vmem:[#allocation9 + $0x20] sm:$0xf]
    %v236 = vld [vmem:[#allocation9 + $0x24] sm:$0xf]
    %v237 = vld [vmem:[#allocation9 + $0x28] sm:$0xf]
    %v238 = vld [vmem:[#allocation9 + $0x2c] sm:$0xf]
    %v239 = vld [vmem:[#allocation9 + $0x30] sm:$0xf]
    %v240 = vld [vmem:[#allocation9 + $0x34] sm:$0xf]
    %v241 = vld [vmem:[#allocation9 + $0x38] sm:$0xf]
    %v242 = vld [vmem:[#allocation9 + $0x3c] sm:$0xf]
    %v259 = vunpack.c.l.b16 %v227
    %v260 = vunpack.c.l.b16 %v228
    %v261 = vunpack.c.l.b16 %v229
    %v262 = vunpack.c.l.b16 %v230
    %v263 = vunpack.c.l.b16 %v231
    %v264 = vunpack.c.l.b16 %v232
    %v265 = vunpack.c.l.b16 %v233
    %v266 = vunpack.c.l.b16 %v234
    %v267 = vunpack.c.l.b16 %v235
    %v268 = vunpack.c.l.b16 %v236
    %v269 = vunpack.c.l.b16 %v237
    %v270 = vunpack.c.l.b16 %v238
    %v271 = vunpack.c.l.b16 %v239
    %v272 = vunpack.c.l.b16 %v240
    %v273 = vunpack.c.l.b16 %v241
    %v274 = vunpack.c.l.b16 %v242
    %v275 = vpack.c.b16 %v260, %v259
    %v276 = vpack.c.b16 %v262, %v261
    %v277 = vpack.c.b16 %v264, %v263
    %v278 = vpack.c.b16 %v266, %v265
    %v279 = vpack.c.b16 %v268, %v267
    %v280 = vpack.c.b16 %v270, %v269
    %v281 = vpack.c.b16 %v272, %v271
    %v282 = vpack.c.b16 %v274, %v273
    %291 = vmatprep.subr.bf16.mxu0 0
    %292 = vmatpush1.bf16.msra.mxu0 %v275
    %293 = vmatprep.subr.bf16.mxu0 0
    %294 = vmatpush1.bf16.msra.mxu0 %v276
    %295 = vmatprep.subr.bf16.mxu0 0
    %296 = vmatpush1.bf16.msra.mxu0 %v277
    %297 = vmatprep.subr.bf16.mxu0 0
    %298 = vmatpush1.bf16.msra.mxu0 %v278
    %299 = vmatprep.subr.bf16.mxu0 0
    %300 = vmatpush1.bf16.msra.mxu0 %v279
    %301 = vmatprep.subr.bf16.mxu0 0
    %302 = vmatpush1.bf16.msra.mxu0 %v280
    %303 = vmatprep.subr.bf16.mxu0 0
    %304 = vmatpush1.bf16.msra.mxu0 %v281
    %305 = vmatprep.subr.bf16.mxu0 0
    %306 = vmatpush1.bf16.msra.mxu0 %v282
    %307 = vmatprep.subr.bf16.mxu0 0
    %308 = vmatpush1.bf16.msra.mxu0 0
    %309 = vmatprep.subr.bf16.mxu0 0
    %310 = vmatpush1.bf16.msra.mxu0 0
    %311 = vmatprep.subr.bf16.mxu0 0
    %312 = vmatpush1.bf16.msra.mxu0 0
    %313 = vmatprep.subr.bf16.mxu0 0
    %314 = vmatpush1.bf16.msra.mxu0 0
    %315 = vmatprep.subr.bf16.mxu0 0
    %316 = vmatpush1.bf16.msra.mxu0 0
    %317 = vmatprep.subr.bf16.mxu0 0
    %318 = vmatpush1.bf16.msra.mxu0 0
    %319 = vmatprep.subr.bf16.mxu0 0
    %320 = vmatpush1.bf16.msra.mxu0 0
    %321 = vmatprep.subr.bf16.mxu0 0
    %322 = vmatpush1.bf16.msra.mxu0 0
    %323 = vmatprep.mubr.bf16.mxu0 0
    %324 = vmatmul.mubr.bf16.gmra.mrb[0].mxu0 %v226
    %v325 = vpop.f32.mrb[0].mxu0
    %v326 = vadd.f32 0.0, %v325
    %v327 = vpop.f32.mrb[0].mxu0
    %v328 = vpop.f32.mrb[0].mxu0
    %v329 = vadd.f32 0.0, %v328
    %v330 = vpop.f32.mrb[0].mxu0
    %331 = vdwg.mxu0
    %v332 = vadd.f32 %v224, %v326
    %v333 = vadd.f32 %v225, %v329
    %334 = vst [vmem:[#allocation3] sm:$0xff] %v332
    %335 = vst [vmem:[#allocation3 + $0x8] sm:$0xff] %v333
    // Predicated region
    $region38: #{tpu_custom_call.1} parent=1 // pred_check
      %p336 = pneg %p63
    $region39: #{tpu_custom_call.1} parent=1 // pred_check_branch
      %338 = sbr.rel (%p336) target = $region41
    $region40: #{tpu_custom_call.1} parent=1 // pred_region
      %v339 = vld [vmem:[#allocation3] sm:$0xff]
      %v340 = vld [vmem:[#allocation3 + $0x8] sm:$0xff]
      %v341 = vld [vmem:[%s4] sm:$0x1]
      %v343 = vlaneseq
      %v344 = vshrl.u32 %v343, 7
      %v345 = vsub.s32 0, %v344
      %v346 = vrot.slane %v341, %v345
      %v348 = vadd.f32 %v339, %v346
      %v349 = vadd.f32 %v340, %v346
      %350 = vst [vmem:[#allocation10] sm:$0xff] %v348
      %351 = vst [vmem:[#allocation10 + $0x8] sm:$0xff] %v349
    $region41: #{tpu_custom_call.1} parent=1 // pred_fallthru
      _
    // Predicated region
    $region42: #{tpu_custom_call.1} parent=1 // pred_check
      _
    $region43: #{tpu_custom_call.1} parent=1 // pred_check_branch
      %353 = sbr.rel (0) target = $region45
    $region44: #{tpu_custom_call.1} parent=1 // pred_region
      %s355 = ssub.s32 256, 256
      %356 = vsyncadd [#allocation6], %s355
      %s357 = sshll.u32 [#allocation10], 4
      %s358 = int_to_ptr.vmem [resolvable:$true] %s357
      %363 = dma.vmem_to_hbm [thread:$0]  %s358, 256, %s5, [#allocation6], 128, 128, 8
    $region45: #{tpu_custom_call.1} parent=1 // pred_fallthru
      _
    // Predicated region
    $region46: #{tpu_custom_call.1} parent=1 // pred_check
      _
    $region47: #{tpu_custom_call.1} parent=1 // pred_check_branch
      %365 = sbr.rel (0) target = $region49
    $region48: #{tpu_custom_call.1} parent=1 // pred_region
      %366 = dma.done [#allocation6], 256
    $region49: #{tpu_custom_call.1} parent=1 // pred_fallthru
      _
    %367 = vsyncpa [#allocation5], 1
    %368 = vsyncpa [#allocation8], 1
    %369 = vsyncpa [#allocation6], 1

// kernel: tpu_custom_call.1
$region0: #{tpu_custom_call.1}
  #allocation0 [shape = 'u32[]', space=smem, size = 0x4, offset = 0x4, fixed_abs, tag = 'smem constant byte address 0x4 - core index']
  #allocation1 [shape = 'u32[144,128]{1,0:T(1,128)}', space=vmem, size = 0x12000, scoped, tag = 'internal scratch']
  #allocation2 [shape = 'bf16[16,128]{1,0:T(16,128)(2,1)}', space=vmem, size = 0x1000, scoped, tag = 'scratch operand']
  #allocation3 [shape = 'f32[16,128]{1,0:T(8,128)}', space=vmem, size = 0x2000, scoped, tag = 'scratch operand']
  %s0 = inlined_call_operand.hbm [shape: f32[16,128], index: 0, kind: input, shape index: {}]
  %s1 = inlined_call_operand.hbm [shape: bf16[128,128], index: 1, kind: input, shape index: {}]
  %s2 = inlined_call_operand.vmem [shape: f32[1,128], index: 2, kind: input, shape index: {}]
  %s3 = inlined_call_operand.hbm [shape: bf16[128,128], index: 3, kind: input, shape index: {}]
  %s4 = inlined_call_operand.vmem [shape: f32[1,128], index: 4, kind: input, shape index: {}]
  %s5 = inlined_call_operand.hbm [shape: f32[16,128], index: 5, kind: output, shape index: {}]
  %s6 = sld [smem:[#allocation0]]
  $region50: #{tpu_custom_call.1} parent=0
    _
  %s8 = ssub.s32 1, %s6
  %s9 = scalar_select 0, %s8, %s6
  $region1: #{tpu_custom_call.1} parent=0
    #allocation4 [shape = 'u8[8192]{0}', space=vmem, size = 0x2000, scoped, tag = 'input window, operand 0, single buffered']
    #allocation5 [shape = 's32[1]{0}', space=sflag, size = 0x4, scoped, tag = 'scoped memory for tpu_custom_call.1']
    #allocation6 [shape = 's32[1]{0}', space=sflag, size = 0x4, scoped, tag = 'scoped memory for tpu_custom_call.1']
    #allocation7 [shape = 'u8[32768]{0}', space=vmem, size = 0x8000, scoped, tag = 'input window, operand 1, single buffered']
    #allocation8 [shape = 's32[1]{0}', space=sflag, size = 0x4, scoped, tag = 'scoped memory for tpu_custom_call.1']
    #allocation9 [shape = 'u8[32768]{0}', space=vmem, size = 0x8000, scoped, tag = 'input window, operand 3, single buffered']
    #allocation10 [shape = 'u8[8192]{0}', space=vmem, size = 0x2000, scoped, tag = 'output window, operand 0, single buffered']
    %10 = vsyncpa [#allocation5], 0
    %11 = vsyncpa [#allocation8], 0
    %12 = vsyncpa [#allocation6], 0
    // Predicated region
    $region2: #{tpu_custom_call.1} parent=1 // pred_check
      _
    $region3: #{tpu_custom_call.1} parent=1 // pred_check_branch
      %14 = sbr.rel (0) target = $region5
    $region4: #{tpu_custom_call.1} parent=1 // pred_region
      %s16 = ssub.s32 256, 256
      %17 = vsyncadd [#allocation5], %s16
      %s18 = sshll.u32 [#allocation4], 4
      %s19 = int_to_ptr.vmem [resolvable:$true] %s18
      %24 = dma.hbm_to_vmem [thread:$0]  %s0, 256, %s19, [#allocation5], 128, 128, 8
    $region5: #{tpu_custom_call.1} parent=1 // pred_fallthru
      _
    // Predicated region
    $region6: #{tpu_custom_call.1} parent=1 // pred_check
      _
    $region7: #{tpu_custom_call.1} parent=1 // pred_check_branch
      %26 = sbr.rel (0) target = $region9
    $region8: #{tpu_custom_call.1} parent=1 // pred_region
      %s28 = ssub.s32 1024, 1024
      %29 = vsyncadd [#allocation8], %s28
      %s30 = sshll.u32 [#allocation7], 4
      %s31 = int_to_ptr.vmem [resolvable:$true] %s30
      %36 = dma.hbm_to_vmem [thread:$0]  %s1, 1024, %s31, [#allocation8], 64, 64, 4
    $region9: #{tpu_custom_call.1} parent=1 // pred_fallthru
      _
    // Predicated region
    $region10: #{tpu_custom_call.1} parent=1 // pred_check
      _
    $region11: #{tpu_custom_call.1} parent=1 // pred_check_branch
      %38 = sbr.rel (0) target = $region13
    $region12: #{tpu_custom_call.1} parent=1 // pred_region
      _
    $region13: #{tpu_custom_call.1} parent=1 // pred_fallthru
      _
    // Predicated region
    $region14: #{tpu_custom_call.1} parent=1 // pred_check
      _
    $region15: #{tpu_custom_call.1} parent=1 // pred_check_branch
      %40 = sbr.rel (0) target = $region17
    $region16: #{tpu_custom_call.1} parent=1 // pred_region
      %s42 = ssub.s32 1024, 1024
      %43 = vsyncadd [#allocation8], %s42
      %s44 = sshll.u32 [#allocation9], 4
      %s45 = int_to_ptr.vmem [resolvable:$true] %s44
      %50 = dma.hbm_to_vmem [thread:$0]  %s3, 1024, %s45, [#allocation8], 64, 64, 4
    $region17: #{tpu_custom_call.1} parent=1 // pred_fallthru
      _
    // Predicated region
    $region18: #{tpu_custom_call.1} parent=1 // pred_check
      _
    $region19: #{tpu_custom_call.1} parent=1 // pred_check_branch
      %52 = sbr.rel (0) target = $region21
    $region20: #{tpu_custom_call.1} parent=1 // pred_region
      _
    $region21: #{tpu_custom_call.1} parent=1 // pred_fallthru
      _
    // Predicated region
    $region22: #{tpu_custom_call.1} parent=1 // pred_check
      _
    $region23: #{tpu_custom_call.1} parent=1 // pred_check_branch
      %54 = sbr.rel (0) target = $region25
    $region24: #{tpu_custom_call.1} parent=1 // pred_region
      %55 = dma.done [#allocation5], 256
    $region25: #{tpu_custom_call.1} parent=1 // pred_fallthru
      _
    // Predicated region
    $region26: #{tpu_custom_call.1} parent=1 // pred_check
      _
    $region27: #{tpu_custom_call.1} parent=1 // pred_check_branch
      %57 = sbr.rel (0) target = $region29
    $region28: #{tpu_custom_call.1} parent=1 // pred_region
      %58 = dma.done [#allocation8], 1024
    $region29: #{tpu_custom_call.1} parent=1 // pred_fallthru
      _
    // Predicated region
    $region30: #{tpu_custom_call.1} parent=1 // pred_check
      _
    $region31: #{tpu_custom_call.1} parent=1 // pred_check_branch
      %60 = sbr.rel (0) target = $region33
    $region32: #{tpu_custom_call.1} parent=1 // pred_region
      %61 = dma.done [#allocation8], 1024
    $region33: #{tpu_custom_call.1} parent=1 // pred_fallthru
      _
    %p63 = scmp.eq.s32.totalorder 0, 0
    // Predicated region
    $region34: #{tpu_custom_call.1} parent=1 // pred_check
      %p64 = pneg %p63
    $region35: #{tpu_custom_call.1} parent=1 // pred_check_branch
      %66 = sbr.rel (%p64) target = $region37
    $region36: #{tpu_custom_call.1} parent=1 // pred_region
      %v67 = vld [vmem:[#allocation4] sm:$0xff]
      %v68 = vld [vmem:[#allocation4 + $0x8] sm:$0xff]
      %69 = vadd.xlane.f32.xlu0 %v67
      %v70 = vpop.xlane.xlu0 %69
      %71 = vadd.xlane.f32.xlu0 %v68
      %v72 = vpop.xlane.xlu0 %71
      %v73 = vmul.f32 %v70, 0.03125
      %v74 = vmul.f32 %v72, 0.03125
      %v75 = vsub.f32 %v67, %v73
      %v76 = vsub.f32 %v68, %v74
      %v77 = vmul.f32 %v75, %v75
      %v78 = vmul.f32 %v76, %v76
      %79 = vadd.xlane.f32.xlu0 %v77
      %v80 = vpop.xlane.xlu0 %79
      %81 = vadd.xlane.f32.xlu0 %v78
      %v82 = vpop.xlane.xlu0 %81
      %v83 = vmul.f32 %v73, %v73
      %v84 = vmul.f32 %v74, %v74
      %v85 = vmul.f32 %v83, 96.0
      %v86 = vmul.f32 %v84, 96.0
      %v87 = vsub.f32 %v80, %v85
      %v88 = vsub.f32 %v82, %v86
      %v89 = vmul.f32 %v87, 0.03125
      %v90 = vmul.f32 %v88, 0.03125
      %v91 = vadd.f32 %v89, 1e-05
      %v92 = vadd.f32 %v90, 1e-05
      %v93 = vrsqrt.pop %v91
      %v94 = vrsqrt.pop %v92
      %v95 = vmul.f32 %v75, %v93
      %v96 = vmul.f32 %v76, %v94
      %v97 = vpack.c.bf16 %v96, %v95
      %98 = vst [vmem:[#allocation2] sm:$0xff] %v97
      %99 = vst [vmem:[#allocation3] sm:$0xff] 0.0
      %100 = vst [vmem:[#allocation3 + $0x8] sm:$0xff] 0.0
    $region37: #{tpu_custom_call.1} parent=1 // pred_fallthru
      _
    %v101 = vld [vmem:[#allocation2] sm:$0xff]
    %v102 = vld [vmem:[#allocation7] sm:$0xf]
    %v103 = vld [vmem:[#allocation7 + $0x4] sm:$0xf]
    %v104 = vld [vmem:[#allocation7 + $0x8] sm:$0xf]
    %v105 = vld [vmem:[#allocation7 + $0xc] sm:$0xf]
    %v106 = vld [vmem:[#allocation7 + $0x10] sm:$0xf]
    %v107 = vld [vmem:[#allocation7 + $0x14] sm:$0xf]
    %v108 = vld [vmem:[#allocation7 + $0x18] sm:$0xf]
    %v109 = vld [vmem:[#allocation7 + $0x1c] sm:$0xf]
    %v110 = vld [vmem:[#allocation7 + $0x20] sm:$0xf]
    %v111 = vld [vmem:[#allocation7 + $0x24] sm:$0xf]
    %v112 = vld [vmem:[#allocation7 + $0x28] sm:$0xf]
    %v113 = vld [vmem:[#allocation7 + $0x2c] sm:$0xf]
    %v114 = vld [vmem:[#allocation7 + $0x30] sm:$0xf]
    %v115 = vld [vmem:[#allocation7 + $0x34] sm:$0xf]
    %v116 = vld [vmem:[#allocation7 + $0x38] sm:$0xf]
    %v117 = vld [vmem:[#allocation7 + $0x3c] sm:$0xf]
    %v118 = vld [vmem:[%s2] sm:$0x1]
    %v120 = vlaneseq
    %v121 = vshrl.u32 %v120, 7
    %v122 = vsub.s32 0, %v121
    %v123 = vrot.slane %v118, %v122
    %v141 = vunpack.c.l.b16 %v102
    %v142 = vunpack.c.l.b16 %v103
    %v143 = vunpack.c.l.b16 %v104
    %v144 = vunpack.c.l.b16 %v105
    %v145 = vunpack.c.l.b16 %v106
    %v146 = vunpack.c.l.b16 %v107
    %v147 = vunpack.c.l.b16 %v108
    %v148 = vunpack.c.l.b16 %v109
    %v149 = vunpack.c.l.b16 %v110
    %v150 = vunpack.c.l.b16 %v111
    %v151 = vunpack.c.l.b16 %v112
    %v152 = vunpack.c.l.b16 %v113
    %v153 = vunpack.c.l.b16 %v114
    %v154 = vunpack.c.l.b16 %v115
    %v155 = vunpack.c.l.b16 %v116
    %v156 = vunpack.c.l.b16 %v117
    %v157 = vpack.c.b16 %v142, %v141
    %v158 = vpack.c.b16 %v144, %v143
    %v159 = vpack.c.b16 %v146, %v145
    %v160 = vpack.c.b16 %v148, %v147
    %v161 = vpack.c.b16 %v150, %v149
    %v162 = vpack.c.b16 %v152, %v151
    %v163 = vpack.c.b16 %v154, %v153
    %v164 = vpack.c.b16 %v156, %v155
    %173 = vmatprep.subr.bf16.mxu0 0
    %174 = vmatpush1.bf16.msra.mxu0 %v157
    %175 = vmatprep.subr.bf16.mxu0 0
    %176 = vmatpush1.bf16.msra.mxu0 %v158
    %177 = vmatprep.subr.bf16.mxu0 0
    %178 = vmatpush1.bf16.msra.mxu0 %v159
    %179 = vmatprep.subr.bf16.mxu0 0
    %180 = vmatpush1.bf16.msra.mxu0 %v160
    %181 = vmatprep.subr.bf16.mxu0 0
    %182 = vmatpush1.bf16.msra.mxu0 %v161
    %183 = vmatprep.subr.bf16.mxu0 0
    %184 = vmatpush1.bf16.msra.mxu0 %v162
    %185 = vmatprep.subr.bf16.mxu0 0
    %186 = vmatpush1.bf16.msra.mxu0 %v163
    %187 = vmatprep.subr.bf16.mxu0 0
    %188 = vmatpush1.bf16.msra.mxu0 %v164
    %189 = vmatprep.subr.bf16.mxu0 0
    %190 = vmatpush1.bf16.msra.mxu0 0
    %191 = vmatprep.subr.bf16.mxu0 0
    %192 = vmatpush1.bf16.msra.mxu0 0
    %193 = vmatprep.subr.bf16.mxu0 0
    %194 = vmatpush1.bf16.msra.mxu0 0
    %195 = vmatprep.subr.bf16.mxu0 0
    %196 = vmatpush1.bf16.msra.mxu0 0
    %197 = vmatprep.subr.bf16.mxu0 0
    %198 = vmatpush1.bf16.msra.mxu0 0
    %199 = vmatprep.subr.bf16.mxu0 0
    %200 = vmatpush1.bf16.msra.mxu0 0
    %201 = vmatprep.subr.bf16.mxu0 0
    %202 = vmatpush1.bf16.msra.mxu0 0
    %203 = vmatprep.subr.bf16.mxu0 0
    %204 = vmatpush1.bf16.msra.mxu0 0
    %205 = vmatprep.mubr.bf16.mxu0 0
    %206 = vmatmul.mubr.bf16.gmra.mrb[0].mxu0 %v101
    %v207 = vpop.f32.mrb[0].mxu0
    %v208 = vadd.f32 %v123, %v207
    %v209 = vpop.f32.mrb[0].mxu0
    %v210 = vpop.f32.mrb[0].mxu0
    %v211 = vadd.f32 %v123, %v210
    %v212 = vpop.f32.mrb[0].mxu0
    %213 = vdwg.mxu0
    %v214 = vmul.f32 %v208, 0.5
    %v215 = vmul.f32 %v211, 0.5
    %v216 = vmul.f32 %v208, 0.70710677
    %v217 = vmul.f32 %v211, 0.70710677
    %v218 = verf.f32.pop %v216
    %v219 = verf.f32.pop %v217
    %v220 = vadd.f32 %v218, 1.0
    %v221 = vadd.f32 %v219, 1.0
    %v222 = vmul.f32 %v214, %v220
    %v223 = vmul.f32 %v215, %v221
    %v224 = vld [vmem:[#allocation3] sm:$0xff]
    %v225 = vld [vmem:[#allocation3 + $0x8] sm:$0xff]
    %v226 = vpack.c.bf16 %v223, %v222
    %v227 = vld [vmem:[#allocation9] sm:$0xf]
    %v228 = vld [vmem:[#allocation9 + $0x4] sm:$0xf]
    %v229 = vld [vmem:[#allocation9 + $0x8] sm:$0xf]
    %v230 = vld [vmem:[#allocation9 + $0xc] sm:$0xf]
    %v231 = vld [vmem:[#allocation9 + $0x10] sm:$0xf]
    %v232 = vld [vmem:[#allocation9 + $0x14] sm:$0xf]
    %v233 = vld [vmem:[#allocation9 + $0x18] sm:$0xf]
    %v234 = vld [vmem:[#allocation9 + $0x1c] sm:$0xf]
    %v235 = vld [vmem:[#allocation9 + $0x20] sm:$0xf]
    %v236 = vld [vmem:[#allocation9 + $0x24] sm:$0xf]
    %v237 = vld [vmem:[#allocation9 + $0x28] sm:$0xf]
    %v238 = vld [vmem:[#allocation9 + $0x2c] sm:$0xf]
    %v239 = vld [vmem:[#allocation9 + $0x30] sm:$0xf]
    %v240 = vld [vmem:[#allocation9 + $0x34] sm:$0xf]
    %v241 = vld [vmem:[#allocation9 + $0x38] sm:$0xf]
    %v242 = vld [vmem:[#allocation9 + $0x3c] sm:$0xf]
    %v259 = vunpack.c.l.b16 %v227
    %v260 = vunpack.c.l.b16 %v228
    %v261 = vunpack.c.l.b16 %v229
    %v262 = vunpack.c.l.b16 %v230
    %v263 = vunpack.c.l.b16 %v231
    %v264 = vunpack.c.l.b16 %v232
    %v265 = vunpack.c.l.b16 %v233
    %v266 = vunpack.c.l.b16 %v234
    %v267 = vunpack.c.l.b16 %v235
    %v268 = vunpack.c.l.b16 %v236
    %v269 = vunpack.c.l.b16 %v237
    %v270 = vunpack.c.l.b16 %v238
    %v271 = vunpack.c.l.b16 %v239
    %v272 = vunpack.c.l.b16 %v240
    %v273 = vunpack.c.l.b16 %v241
    %v274 = vunpack.c.l.b16 %v242
    %v275 = vpack.c.b16 %v260, %v259
    %v276 = vpack.c.b16 %v262, %v261
    %v277 = vpack.c.b16 %v264, %v263
    %v278 = vpack.c.b16 %v266, %v265
    %v279 = vpack.c.b16 %v268, %v267
    %v280 = vpack.c.b16 %v270, %v269
    %v281 = vpack.c.b16 %v272, %v271
    %v282 = vpack.c.b16 %v274, %v273
    %291 = vmatprep.subr.bf16.mxu0 0
    %292 = vmatpush1.bf16.msra.mxu0 %v275
    %293 = vmatprep.subr.bf16.mxu0 0
    %294 = vmatpush1.bf16.msra.mxu0 %v276
    %295 = vmatprep.subr.bf16.mxu0 0
    %296 = vmatpush1.bf16.msra.mxu0 %v277
    %297 = vmatprep.subr.bf16.mxu0 0
    %298 = vmatpush1.bf16.msra.mxu0 %v278
    %299 = vmatprep.subr.bf16.mxu0 0
    %300 = vmatpush1.bf16.msra.mxu0 %v279
    %301 = vmatprep.subr.bf16.mxu0 0
    %302 = vmatpush1.bf16.msra.mxu0 %v280
    %303 = vmatprep.subr.bf16.mxu0 0
    %304 = vmatpush1.bf16.msra.mxu0 %v281
    %305 = vmatprep.subr.bf16.mxu0 0
    %306 = vmatpush1.bf16.msra.mxu0 %v282
    %307 = vmatprep.subr.bf16.mxu0 0
    %308 = vmatpush1.bf16.msra.mxu0 0
    %309 = vmatprep.subr.bf16.mxu0 0
    %310 = vmatpush1.bf16.msra.mxu0 0
    %311 = vmatprep.subr.bf16.mxu0 0
    %312 = vmatpush1.bf16.msra.mxu0 0
    %313 = vmatprep.subr.bf16.mxu0 0
    %314 = vmatpush1.bf16.msra.mxu0 0
    %315 = vmatprep.subr.bf16.mxu0 0
    %316 = vmatpush1.bf16.msra.mxu0 0
    %317 = vmatprep.subr.bf16.mxu0 0
    %318 = vmatpush1.bf16.msra.mxu0 0
    %319 = vmatprep.subr.bf16.mxu0 0
    %320 = vmatpush1.bf16.msra.mxu0 0
    %321 = vmatprep.subr.bf16.mxu0 0
    %322 = vmatpush1.bf16.msra.mxu0 0
    %323 = vmatprep.mubr.bf16.mxu0 0
    %324 = vmatmul.mubr.bf16.gmra.mrb[0].mxu0 %v226
    %v325 = vpop.f32.mrb[0].mxu0
    %v326 = vadd.f32 0.0, %v325
    %v327 = vpop.f32.mrb[0].mxu0
    %v328 = vpop.f32.mrb[0].mxu0
    %v329 = vadd.f32 0.0, %v328
    %v330 = vpop.f32.mrb[0].mxu0
    %331 = vdwg.mxu0
    %v332 = vadd.f32 %v224, %v326
    %v333 = vadd.f32 %v225, %v329
    %334 = vst [vmem:[#allocation3] sm:$0xff] %v332
    %335 = vst [vmem:[#allocation3 + $0x8] sm:$0xff] %v333
    // Predicated region
    $region38: #{tpu_custom_call.1} parent=1 // pred_check
      %p336 = pneg %p63
    $region39: #{tpu_custom_call.1} parent=1 // pred_check_branch
      %338 = sbr.rel (%p336) target = $region41
    $region40: #{tpu_custom_call.1} parent=1 // pred_region
      %v339 = vld [vmem:[#allocation3] sm:$0xff]
      %v340 = vld [vmem:[#allocation3 + $0x8] sm:$0xff]
      %v341 = vld [vmem:[%s4] sm:$0x1]
      %v343 = vlaneseq
      %v344 = vshrl.u32 %v343, 7
      %v345 = vsub.s32 0, %v344
      %v346 = vrot.slane %v341, %v345
      %v348 = vadd.f32 %v339, %v346
      %v349 = vadd.f32 %v340, %v346
      %350 = vst [vmem:[#allocation10] sm:$0xff] %v348
      %351 = vst [vmem:[#allocation10 + $0x8] sm:$0xff] %v349
    $region41: #{tpu_custom_call.1} parent=1 // pred_fallthru
      _
    // Predicated region
    $region42: #{tpu_custom_call.1} parent=1 // pred_check
      _
    $region43: #{tpu_custom_call.1} parent=1 // pred_check_branch
      %353 = sbr.rel (0) target = $region45
    $region44: #{tpu_custom_call.1} parent=1 // pred_region
      %s355 = ssub.s32 256, 256
      %356 = vsyncadd [#allocation6], %s355
      %s357 = sshll.u32 [#allocation10], 4
      %s358 = int_to_ptr.vmem [resolvable:$true] %s357
      %363 = dma.vmem_to_hbm [thread:$0]  %s358, 256, %s5, [#allocation6], 128, 128, 8
    $region45: #{tpu_custom_call.1} parent=1 // pred_fallthru
      _
    // Predicated region
    $region46: #{tpu_custom_call.1} parent=1 // pred_check
      _
    $region47: #{tpu_custom_call.1} parent=1 // pred_check_branch
      %365 = sbr.rel (0) target = $region49
    $region48: #{tpu_custom_call.1} parent=1 // pred_region
      %366 = dma.done [#allocation6], 256
    $region49: #{tpu_custom_call.1} parent=1 // pred_fallthru
      _
    %367 = vsyncpa [#allocation5], 1
    %368 = vsyncpa [#allocation8], 1
    %369 = vsyncpa [#allocation6], 1

</llo_original>
